<compile_context>
chip_gen: v7x
topology: tpu7x:2x2x1
jax: 0.10.0
libtpu: 0.0.40
codegen_flags: <defaults>
</compile_context>

<pallas_src>
import functools

import jax
import jax.numpy as jnp
from jax.experimental import pallas as pl
from jax.experimental.pallas import tpu as pltpu


def _round_up(x, m):
    return ((x + m - 1) // m) * m


def critic_kernel(x_ref, w1t_ref, b1_ref, w2t_ref, b2_ref, w3t_ref, b3_ref,
                  out_ref):
    # x_ref: (in_dim, TB) feature-major activation tile.
    # Normalization is already folded into w1t / b1.
    x = x_ref[...]

    # layer 1: (h1, in_dim) @ (in_dim, TB) + b1, ReLU
    h = jnp.dot(w1t_ref[...], x, preferred_element_type=jnp.float32) + b1_ref[...]
    h = jnp.maximum(h, 0.0)

    # layer 2: (h2, h1) @ (h1, TB) + b2, ReLU
    h = jnp.dot(w2t_ref[...], h, preferred_element_type=jnp.float32) + b2_ref[...]
    h = jnp.maximum(h, 0.0)

    # output layer: (1, h2) @ (h2, TB) + b3 (scalar from SMEM) -> lane-dense (1, TB)
    out_ref[...] = (jnp.dot(w3t_ref[...], h, preferred_element_type=jnp.float32)
                    + b3_ref[0])


def prepare_critic_params(p):
    """One-time (offline) transform of the torch-layout params into the kernel
    layout: fold state normalization into W1/b1, merge the state/action halves
    of W1, and transpose everything to feature-major."""
    inv_std = 1.0 / p["state_std"]                                   # (S,)
    w1s_folded = p["w1_s"] * inv_std[:, None]                        # (S, h1)
    b1_folded = p["b1"] - (p["state_avg"] * inv_std) @ p["w1_s"]     # (h1,)
    w1 = jnp.concatenate([w1s_folded, p["w1_a"]], axis=0)            # (S+A, h1)
    return {
        "w1t": jnp.asarray(w1.T, jnp.float32),                       # (h1, S+A)
        "b1c": jnp.asarray(b1_folded.reshape(-1, 1), jnp.float32),   # (h1, 1)
        "w2t": jnp.asarray(p["w2"].T, jnp.float32),                  # (h2, h1)
        "b2c": jnp.asarray(p["b2"].reshape(-1, 1), jnp.float32),     # (h2, 1)
        "w3t": jnp.asarray(p["w3"].T, jnp.float32),                  # (1, h2)
        "b3": jnp.asarray(p["b3"].reshape(1), jnp.float32),          # (1,) SMEM scalar
    }


@functools.partial(jax.jit, static_argnames=("block_b",))
def critic_forward(state, action, prepared, block_b=1024):
    """value = Critic(state, action); returns (B, 1) float32."""
    B = state.shape[0]
    h1, in_dim = prepared["w1t"].shape
    h2 = prepared["w2t"].shape[0]

    # Batch tile: multiple of 128 lanes (unmasked, lane-dense stores), capped
    # at block_b (rounded to 128).  Bigger tiles amortize the ~0.35 us/step
    # grid overhead; per-block VMEM stays trivial even at 1024.
    tb = min(_round_up(block_b, 128), _round_up(B, 128))
    b_pad = _round_up(B, tb)

    # Layout plumbing in the wrapper: concat state/action once and go
    # feature-major so the batch sits on lanes inside the kernel.
    x_t = jnp.concatenate([state, action], axis=1).T.astype(jnp.float32)
    if b_pad != B:
        x_t = jnp.pad(x_t, ((0, 0), (0, b_pad - B)))

    grid = (b_pad // tb,)
    out_t = pl.pallas_call(
        critic_kernel,
        out_shape=jax.ShapeDtypeStruct((1, b_pad), jnp.float32),
        grid=grid,
        in_specs=[
            pl.BlockSpec((in_dim, tb), lambda i: (0, i)),      # activations: tiled over batch
            pl.BlockSpec((h1, in_dim), lambda i: (0, 0)),      # weights/biases: resident
            pl.BlockSpec((h1, 1), lambda i: (0, 0)),
            pl.BlockSpec((h2, h1), lambda i: (0, 0)),
            pl.BlockSpec((h2, 1), lambda i: (0, 0)),
            pl.BlockSpec((1, h2), lambda i: (0, 0)),
            pl.BlockSpec(memory_space=pltpu.MemorySpace.SMEM),  # b3 scalar
        ],
        out_specs=pl.BlockSpec((1, tb), lambda i: (0, i)),
        compiler_params=pltpu.CompilerParams(
            dimension_semantics=("parallel",)),
    )(x_t, prepared["w1t"], prepared["b1c"], prepared["w2t"],
      prepared["b2c"], prepared["w3t"], prepared["b3"])

    # (1, B) row-major has the same element order as (B, 1): free reshape.
    return out_t[0, :B].reshape(B, 1)


def orthogonal(key, shape, gain=1.0):
    # deterministic orthogonal init (same semantics as torch orthogonal_)
    rows, cols = shape
    n = max(rows, cols)
    a = jax.random.normal(key, (n, n), dtype=jnp.float32)
    q, r = jnp.linalg.qr(a)
    q = q * jnp.sign(jnp.diag(r))[None, :]
    return gain * q[:rows, :cols]


def make_params(key, state_dim, action_dim, dims):
    """Raw (torch-layout) Critic parameters."""
    in_dim = state_dim + action_dim
    h1, h2 = dims
    k1, k2, k3, k4, k5 = jax.random.split(key, 5)
    w1 = jax.random.normal(k1, (in_dim, h1), jnp.float32) / jnp.sqrt(in_dim)
    w2 = jax.random.normal(k2, (h1, h2), jnp.float32) / jnp.sqrt(h1)
    # output layer: orthogonal(std=0.5), bias = 1e-6 (layer_init_with_orthogonal)
    w3 = orthogonal(k3, (h2, 1), gain=0.5)
    # non-trivial running stats so the normalization folding is exercised
    state_avg = 0.1 * jax.random.normal(k4, (state_dim,), jnp.float32)
    state_std = 0.5 + jax.random.uniform(k5, (state_dim,), jnp.float32)
    return {
        "state_avg": state_avg,
        "state_std": state_std,
        "w1_s": w1[:state_dim],
        "w1_a": w1[state_dim:],
        "b1": jnp.zeros((h1,), jnp.float32),
        "w2": w2,
        "b2": jnp.zeros((h2,), jnp.float32),
        "w3": w3,
        "b3": jnp.full((1,), 1e-6, jnp.float32),
    }


def reference_forward(state, action, p):
    s = (state - p["state_avg"]) / p["state_std"]
    x = jnp.concatenate([s, action], axis=1)
    w1 = jnp.concatenate([p["w1_s"], p["w1_a"]], axis=0)
    h = jnp.maximum(x @ w1 + p["b1"], 0.0)
    h = jnp.maximum(h @ p["w2"] + p["b2"], 0.0)
    return h @ p["w3"] + p["b3"]


if __name__ == "__main__":
    state_dim, action_dim = 16, 8
    dims = (32, 32)

    key = jax.random.PRNGKey(0)
    k_s, k_a, k_p = jax.random.split(key, 3)
    params = make_params(k_p, state_dim, action_dim, dims)
    prepared = prepare_critic_params(params)

    # Small-batch case (single block, padded to 128 lanes).
    B = 8
    state = jax.random.normal(k_s, (B, state_dim), jnp.float32)
    action = jax.random.normal(k_a, (B, action_dim), jnp.float32)
    out = jax.block_until_ready(critic_forward(state, action, prepared))
    ref = reference_forward(state, action, params)
    assert out.shape == (B, 1)
    assert jnp.allclose(out, ref, atol=1e-4, rtol=1e-4), \
        float(jnp.max(jnp.abs(out - ref)))

    # Multi-block case (exercises the batch grid + padding path).
    B2 = 300
    state2 = jax.random.normal(k_s, (B2, state_dim), jnp.float32)
    action2 = jax.random.normal(k_a, (B2, action_dim), jnp.float32)
    out2 = jax.block_until_ready(
        critic_forward(state2, action2, prepared, block_b=128))
    ref2 = reference_forward(state2, action2, params)
    assert out2.shape == (B2, 1)
    assert jnp.allclose(out2, ref2, atol=1e-4, rtol=1e-4), \
        float(jnp.max(jnp.abs(out2 - ref2)))

    print("KERNEL_OK")
</pallas_src>

<mosaic_0001>
module attributes {stable_mosaic.version = 11 : i64} {
  func.func @critic_kernel(%arg0: i32, %arg1: memref<24x128xf32, #tpu.memory_space<vmem>>, %arg2: memref<32x24xf32, #tpu.memory_space<vmem>>, %arg3: memref<32x1xf32, #tpu.memory_space<vmem>>, %arg4: memref<32x32xf32, #tpu.memory_space<vmem>>, %arg5: memref<32x1xf32, #tpu.memory_space<vmem>>, %arg6: memref<1x32xf32, #tpu.memory_space<vmem>>, %arg7: memref<1xf32, #tpu.memory_space<smem>>, %arg8: memref<1x128xf32, #tpu.memory_space<vmem>>) attributes {dimension_semantics = [#tpu.dimension_semantics<parallel>], iteration_bounds = array<i64: 1>, scalar_prefetch = 0 : i64, scratch_operands = 0 : i64, tpu.core_type = #tpu.core_type<tc>, window_params = [{transform_indices = @transform_0, window_bounds = array<i64: 24, 128>}, {pipeline_mode = #tpu.pipeline_mode<synchronous>, transform_indices = @transform_1, window_bounds = array<i64: 32, 24>}, {pipeline_mode = #tpu.pipeline_mode<synchronous>, transform_indices = @transform_2, window_bounds = array<i64: 32, 1>}, {pipeline_mode = #tpu.pipeline_mode<synchronous>, transform_indices = @transform_3, window_bounds = array<i64: 32, 32>}, {pipeline_mode = #tpu.pipeline_mode<synchronous>, transform_indices = @transform_4, window_bounds = array<i64: 32, 1>}, {pipeline_mode = #tpu.pipeline_mode<synchronous>, transform_indices = @transform_5, window_bounds = array<i64: 1, 32>}, {transform_indices = @transform_6, window_bounds = array<i64: 1>}, {transform_indices = @transform_7, window_bounds = array<i64: 1, 128>}]} {
    %c0 = arith.constant 0 : index
    %c0_0 = arith.constant 0 : index
    %0 = vector.load %arg1[%c0, %c0_0] : memref<24x128xf32, #tpu.memory_space<vmem>>, vector<24x128xf32>
    %c0_1 = arith.constant 0 : index
    %c0_2 = arith.constant 0 : index
    %1 = vector.load %arg2[%c0_1, %c0_2] : memref<32x24xf32, #tpu.memory_space<vmem>>, vector<32x24xf32>
    %cst = arith.constant dense<0.000000e+00> : vector<32x128xf32>
    %2 = tpu.matmul %1, %0, %cst {dimension_numbers = #tpu.dot_dimension_numbers<[1], [0], [0], [1], [0, 0, 1, 1], [], []>} : vector<32x24xf32>, vector<24x128xf32>, vector<32x128xf32> -> vector<32x128xf32>
    %c0_3 = arith.constant 0 : index
    %c0_4 = arith.constant 0 : index
    %3 = vector.load %arg3[%c0_3, %c0_4] : memref<32x1xf32, #tpu.memory_space<vmem>>, vector<32x1xf32>
    %4 = vector.broadcast %3 : vector<32x1xf32> to vector<32x128xf32>
    %5 = arith.addf %2, %4 : vector<32x128xf32>
    %cst_5 = arith.constant 0.000000e+00 : f32
    %6 = vector.broadcast %cst_5 : f32 to vector<32x128xf32>
    %7 = arith.maximumf %5, %6 : vector<32x128xf32>
    %c0_6 = arith.constant 0 : index
    %c0_7 = arith.constant 0 : index
    %8 = vector.load %arg4[%c0_6, %c0_7] : memref<32x32xf32, #tpu.memory_space<vmem>>, vector<32x32xf32>
    %cst_8 = arith.constant dense<0.000000e+00> : vector<32x128xf32>
    %9 = tpu.matmul %8, %7, %cst_8 {dimension_numbers = #tpu.dot_dimension_numbers<[1], [0], [0], [1], [0, 0, 1, 1], [], []>} : vector<32x32xf32>, vector<32x128xf32>, vector<32x128xf32> -> vector<32x128xf32>
    %c0_9 = arith.constant 0 : index
    %c0_10 = arith.constant 0 : index
    %10 = vector.load %arg5[%c0_9, %c0_10] : memref<32x1xf32, #tpu.memory_space<vmem>>, vector<32x1xf32>
    %11 = vector.broadcast %10 : vector<32x1xf32> to vector<32x128xf32>
    %12 = arith.addf %9, %11 : vector<32x128xf32>
    %cst_11 = arith.constant 0.000000e+00 : f32
    %13 = vector.broadcast %cst_11 : f32 to vector<32x128xf32>
    %14 = arith.maximumf %12, %13 : vector<32x128xf32>
    %c0_12 = arith.constant 0 : index
    %c0_13 = arith.constant 0 : index
    %15 = vector.load %arg6[%c0_12, %c0_13] : memref<1x32xf32, #tpu.memory_space<vmem>>, vector<1x32xf32>
    %cst_14 = arith.constant dense<0.000000e+00> : vector<1x128xf32>
    %16 = tpu.matmul %15, %14, %cst_14 {dimension_numbers = #tpu.dot_dimension_numbers<[1], [0], [0], [1], [0, 0, 1, 1], [], []>} : vector<1x32xf32>, vector<32x128xf32>, vector<1x128xf32> -> vector<1x128xf32>
    %c0_15 = arith.constant 0 : index
    %17 = memref.load %arg7[%c0_15] : memref<1xf32, #tpu.memory_space<smem>>
    %18 = vector.broadcast %17 : f32 to vector<1x128xf32>
    %19 = arith.addf %16, %18 : vector<1x128xf32>
    %c0_16 = arith.constant 0 : index
    %c0_17 = arith.constant 0 : index
    %20 = vector.load %arg8[%c0_16, %c0_17] : memref<1x128xf32, #tpu.memory_space<vmem>>, vector<1x128xf32>
    tpu.vector_store %arg8[%c0_16, %c0_17], %19 {strides = array<i32>} : memref<1x128xf32, #tpu.memory_space<vmem>>, vector<1x128xf32>,
    return
  }
  func.func @transform_0(%arg0: i32) -> (i32, i32) {
    %c0_i32 = arith.constant 0 : i32
    %c0_i32_0 = arith.constant 0 : i32
    return %c0_i32, %arg0 : i32, i32
  }
  func.func @transform_1(%arg0: i32) -> (i32, i32) {
    %c0_i32 = arith.constant 0 : i32
    %c0_i32_0 = arith.constant 0 : i32
    %c0_i32_1 = arith.constant 0 : i32
    return %c0_i32, %c0_i32_0 : i32, i32
  }
  func.func @transform_2(%arg0: i32) -> (i32, i32) {
    %c0_i32 = arith.constant 0 : i32
    %c0_i32_0 = arith.constant 0 : i32
    %c0_i32_1 = arith.constant 0 : i32
    return %c0_i32, %c0_i32_0 : i32, i32
  }
  func.func @transform_3(%arg0: i32) -> (i32, i32) {
    %c0_i32 = arith.constant 0 : i32
    %c0_i32_0 = arith.constant 0 : i32
    %c0_i32_1 = arith.constant 0 : i32
    return %c0_i32, %c0_i32_0 : i32, i32
  }
  func.func @transform_4(%arg0: i32) -> (i32, i32) {
    %c0_i32 = arith.constant 0 : i32
    %c0_i32_0 = arith.constant 0 : i32
    %c0_i32_1 = arith.constant 0 : i32
    return %c0_i32, %c0_i32_0 : i32, i32
  }
  func.func @transform_5(%arg0: i32) -> (i32, i32) {
    %c0_i32 = arith.constant 0 : i32
    %c0_i32_0 = arith.constant 0 : i32
    %c0_i32_1 = arith.constant 0 : i32
    return %c0_i32, %c0_i32_0 : i32, i32
  }
  func.func @transform_6(%arg0: i32) -> i32 {
    %c0_i32 = arith.constant 0 : i32
    %c0_i32_0 = arith.constant 0 : i32
    return %c0_i32 : i32
  }
  func.func @transform_7(%arg0: i32) -> (i32, i32) {
    %c0_i32 = arith.constant 0 : i32
    %c0_i32_0 = arith.constant 0 : i32
    return %c0_i32, %arg0 : i32, i32
  }
}

</mosaic_0001>

<llo_original>
// kernel: critic_forward.1
$region0: #{critic_forward.1}
  #allocation0 [shape = 'u32[]', space=smem, size = 0x4, offset = 0x4, fixed_abs, tag = 'smem constant byte address 0x4 - core index']
  #allocation1 [shape = 'u32[144,128]{1,0:T(1,128)}', space=vmem, size = 0x12000, scoped, tag = 'internal scratch']
  #allocation2 [shape = 'f32[1]{0:T(128)S(6)}', space=smem, size = 0x200, scoped, tag = 'scoped memory for critic_forward.1']
  %s0 = inlined_call_operand.vmem [shape: f32[24,128], index: 0, kind: input, shape index: {}]
  %s1 = inlined_call_operand.vmem [shape: f32[32,24], index: 1, kind: input, shape index: {}]
  %s2 = inlined_call_operand.vmem [shape: f32[32,1], index: 2, kind: input, shape index: {}]
  %s3 = inlined_call_operand.vmem [shape: f32[32,32], index: 3, kind: input, shape index: {}]
  %s4 = inlined_call_operand.vmem [shape: f32[32,1], index: 4, kind: input, shape index: {}]
  %s5 = inlined_call_operand.vmem [shape: f32[1,32], index: 5, kind: input, shape index: {}]
  %s6 = inlined_call_operand.<no memory space> [shape: f32[1], index: 6, kind: input, shape index: {}]
  %s7 = inlined_call_operand.vmem [shape: f32[1,128], index: 7, kind: output, shape index: {}]
  %s8 = sld [smem:[#allocation0]]
  $region38: #{critic_forward.1} parent=0
    _
  %s10 = ssub.s32 1, %s8
  %s11 = scalar_select 0, %s10, %s8
  %12 = sst [smem:[#allocation2]] %s6
  // Predicated region
  $region2: #{critic_forward.1} parent=0 // pred_check
    _
  $region3: #{critic_forward.1} parent=0 // pred_check_branch
    %14 = sbr.rel (0) target = $region5
  $region4: #{critic_forward.1} parent=0 // pred_region
    _
  $region5: #{critic_forward.1} parent=0 // pred_fallthru
    _
  // Predicated region
  $region6: #{critic_forward.1} parent=0 // pred_check
    _
  $region7: #{critic_forward.1} parent=0 // pred_check_branch
    %16 = sbr.rel (0) target = $region9
  $region8: #{critic_forward.1} parent=0 // pred_region
    _
  $region9: #{critic_forward.1} parent=0 // pred_fallthru
    _
  // Predicated region
  $region10: #{critic_forward.1} parent=0 // pred_check
    _
  $region11: #{critic_forward.1} parent=0 // pred_check_branch
    %18 = sbr.rel (0) target = $region13
  $region12: #{critic_forward.1} parent=0 // pred_region
    _
  $region13: #{critic_forward.1} parent=0 // pred_fallthru
    _
  // Predicated region
  $region14: #{critic_forward.1} parent=0 // pred_check
    _
  $region15: #{critic_forward.1} parent=0 // pred_check_branch
    %20 = sbr.rel (0) target = $region17
  $region16: #{critic_forward.1} parent=0 // pred_region
    _
  $region17: #{critic_forward.1} parent=0 // pred_fallthru
    _
  // Predicated region
  $region18: #{critic_forward.1} parent=0 // pred_check
    _
  $region19: #{critic_forward.1} parent=0 // pred_check_branch
    %22 = sbr.rel (0) target = $region21
  $region20: #{critic_forward.1} parent=0 // pred_region
    _
  $region21: #{critic_forward.1} parent=0 // pred_fallthru
    _
  // Predicated region
  $region22: #{critic_forward.1} parent=0 // pred_check
    _
  $region23: #{critic_forward.1} parent=0 // pred_check_branch
    %24 = sbr.rel (0) target = $region25
  $region24: #{critic_forward.1} parent=0 // pred_region
    _
  $region25: #{critic_forward.1} parent=0 // pred_fallthru
    _
  // Predicated region
  $region26: #{critic_forward.1} parent=0 // pred_check
    _
  $region27: #{critic_forward.1} parent=0 // pred_check_branch
    %26 = sbr.rel (0) target = $region29
  $region28: #{critic_forward.1} parent=0 // pred_region
    _
  $region29: #{critic_forward.1} parent=0 // pred_fallthru
    _
  %v27 = vld [vmem:[%s0] sm:$0xff]
  %v28 = vld [vmem:[%s0 + $0x8] sm:$0xff]
  %v29 = vld [vmem:[%s0 + $0x10] sm:$0xff]
  %v30 = vld [vmem:[%s1] sm:$0xff]
  %v31 = vld [vmem:[%s1 + $0x8] sm:$0xff]
  %v32 = vld [vmem:[%s1 + $0x10] sm:$0xff]
  %v33 = vld [vmem:[%s1 + $0x18] sm:$0xff]
  %v34 = vld [vmem:[%s2] sm:$0xff]
  %v35 = vld [vmem:[%s2 + $0x8] sm:$0xff]
  %v36 = vld [vmem:[%s2 + $0x10] sm:$0xff]
  %v37 = vld [vmem:[%s2 + $0x18] sm:$0xff]
  %39 = vset.pattern.permute.xlu0 0
  %40 = vperm.xlu0 %39, %v34
  %v41 = vpop.permute.xlu0 %40
  %44 = vset.pattern.permute.xlu0 0
  %45 = vperm.xlu0 %44, %v35
  %v46 = vpop.permute.xlu0 %45
  %49 = vset.pattern.permute.xlu0 0
  %50 = vperm.xlu0 %49, %v36
  %v51 = vpop.permute.xlu0 %50
  %54 = vset.pattern.permute.xlu0 0
  %55 = vperm.xlu0 %54, %v37
  %v56 = vpop.permute.xlu0 %55
  %vm58 = vcmask 195584
  %v60 = vsel %vm58, %v30, 0
  %v63 = vsel %vm58, %v31, 0
  %v66 = vsel %vm58, %v32, 0
  %v69 = vsel %vm58, %v33, 0
  %71 = vmatprep.subr.mxu0 0.0
  %72 = vmatpush1.msra.mxu0 %v27
  %73 = vmatprep.subr.mxu0 0.0
  %74 = vmatpush1.msra.mxu0 %v28
  %75 = vmatprep.subr.mxu0 0.0
  %76 = vmatpush1.msra.mxu0 %v29
  %77 = vmatprep.subr.mxu0 0.0
  %78 = vmatpush1.msra.mxu0 0.0
  %79 = vmatprep.subr.mxu0 0.0
  %80 = vmatpush1.msra.mxu0 0.0
  %81 = vmatprep.subr.mxu0 0.0
  %82 = vmatpush1.msra.mxu0 0.0
  %83 = vmatprep.subr.mxu0 0.0
  %84 = vmatpush1.msra.mxu0 0.0
  %85 = vmatprep.subr.mxu0 0.0
  %86 = vmatpush1.msra.mxu0 0.0
  %87 = vmatprep.subr.mxu0 0.0
  %88 = vmatpush1.msra.mxu0 0.0
  %89 = vmatprep.subr.mxu0 0.0
  %90 = vmatpush1.msra.mxu0 0.0
  %91 = vmatprep.subr.mxu0 0.0
  %92 = vmatpush1.msra.mxu0 0.0
  %93 = vmatprep.subr.mxu0 0.0
  %94 = vmatpush1.msra.mxu0 0.0
  %95 = vmatprep.subr.mxu0 0.0
  %96 = vmatpush1.msra.mxu0 0.0
  %97 = vmatprep.subr.mxu0 0.0
  %98 = vmatpush1.msra.mxu0 0.0
  %99 = vmatprep.subr.mxu0 0.0
  %100 = vmatpush1.msra.mxu0 0.0
  %101 = vmatprep.subr.mxu0 0.0
  %102 = vmatpush1.msra.mxu0 0.0
  %103 = vmatprep.subr.mxu0 0.0
  %104 = vmatpush1.msra.mxu0 0.0
  %105 = vmatprep.subr.mxu0 0.0
  %106 = vmatpush1.msra.mxu0 0.0
  %107 = vmatprep.subr.mxu0 0.0
  %108 = vmatpush1.msra.mxu0 0.0
  %109 = vmatprep.subr.mxu0 0.0
  %110 = vmatpush1.msra.mxu0 0.0
  %111 = vmatprep.subr.mxu0 0.0
  %112 = vmatpush1.msra.mxu0 0.0
  %113 = vmatprep.subr.mxu0 0.0
  %114 = vmatpush1.msra.mxu0 0.0
  %115 = vmatprep.subr.mxu0 0.0
  %116 = vmatpush1.msra.mxu0 0.0
  %117 = vmatprep.subr.mxu0 0.0
  %118 = vmatpush1.msra.mxu0 0.0
  %119 = vmatprep.subr.mxu0 0.0
  %120 = vmatpush1.msra.mxu0 0.0
  %121 = vmatprep.subr.mxu0 0.0
  %122 = vmatpush1.msra.mxu0 0.0
  %123 = vmatprep.subr.mxu0 0.0
  %124 = vmatpush1.msra.mxu0 0.0
  %125 = vmatprep.subr.mxu0 0.0
  %126 = vmatpush1.msra.mxu0 0.0
  %127 = vmatprep.subr.mxu0 0.0
  %128 = vmatpush1.msra.mxu0 0.0
  %129 = vmatprep.subr.mxu0 0.0
  %130 = vmatpush1.msra.mxu0 0.0
  %131 = vmatprep.subr.mxu0 0.0
  %132 = vmatpush1.msra.mxu0 0.0
  %133 = vmatprep.subr.mxu0 0.0
  %134 = vmatpush1.msra.mxu0 0.0
  %135 = vmatprep.mubr.f32.mxu0 0.0
  %136 = vmatmul.mubr.f32.gmra.mrb[0].mxu0 %v60
  %v137 = vpop.f32.mrb[0].mxu0
  %v138 = vadd.f32 %v41, %v137
  %v139 = vpop.f32.mrb[0].mxu0
  %140 = vmatprep.mubr.f32.mxu0 0.0
  %141 = vmatmul.mubr.f32.gmra.mrb[0].mxu0 %v63
  %v142 = vpop.f32.mrb[0].mxu0
  %v143 = vadd.f32 %v46, %v142
  %v144 = vpop.f32.mrb[0].mxu0
  %145 = vmatprep.mubr.f32.mxu0 0.0
  %146 = vmatmul.mubr.f32.gmra.mrb[0].mxu0 %v66
  %v147 = vpop.f32.mrb[0].mxu0
  %v148 = vadd.f32 %v51, %v147
  %v149 = vpop.f32.mrb[0].mxu0
  %150 = vmatprep.mubr.f32.mxu0 0.0
  %151 = vmatmul.mubr.f32.gmra.mrb[0].mxu0 %v69
  %v152 = vpop.f32.mrb[0].mxu0
  %v153 = vadd.f32 %v56, %v152
  %v154 = vpop.f32.mrb[0].mxu0
  %155 = vdwg.mxu0
  %v156 = vmax.f32 %v138, 0.0
  %v157 = vmax.f32 %v143, 0.0
  %v158 = vmax.f32 %v148, 0.0
  %v159 = vmax.f32 %v153, 0.0
  %v160 = vld [vmem:[%s3] sm:$0xff]
  %v161 = vld [vmem:[%s3 + $0x8] sm:$0xff]
  %v162 = vld [vmem:[%s3 + $0x10] sm:$0xff]
  %v163 = vld [vmem:[%s3 + $0x18] sm:$0xff]
  %v164 = vld [vmem:[%s4] sm:$0xff]
  %v165 = vld [vmem:[%s4 + $0x8] sm:$0xff]
  %v166 = vld [vmem:[%s4 + $0x10] sm:$0xff]
  %v167 = vld [vmem:[%s4 + $0x18] sm:$0xff]
  %169 = vset.pattern.permute.xlu0 0
  %170 = vperm.xlu0 %169, %v164
  %v171 = vpop.permute.xlu0 %170
  %174 = vset.pattern.permute.xlu0 0
  %175 = vperm.xlu0 %174, %v165
  %v176 = vpop.permute.xlu0 %175
  %179 = vset.pattern.permute.xlu0 0
  %180 = vperm.xlu0 %179, %v166
  %v181 = vpop.permute.xlu0 %180
  %184 = vset.pattern.permute.xlu0 0
  %185 = vperm.xlu0 %184, %v167
  %v186 = vpop.permute.xlu0 %185
  %vm188 = vcmask 261120
  %v190 = vsel %vm188, %v160, 0
  %v193 = vsel %vm188, %v161, 0
  %v196 = vsel %vm188, %v162, 0
  %v199 = vsel %vm188, %v163, 0
  %201 = vmatprep.subr.mxu0 0.0
  %202 = vmatpush1.msra.mxu0 %v156
  %203 = vmatprep.subr.mxu0 0.0
  %204 = vmatpush1.msra.mxu0 %v157
  %205 = vmatprep.subr.mxu0 0.0
  %206 = vmatpush1.msra.mxu0 %v158
  %207 = vmatprep.subr.mxu0 0.0
  %208 = vmatpush1.msra.mxu0 %v159
  %209 = vmatprep.subr.mxu0 0.0
  %210 = vmatpush1.msra.mxu0 0.0
  %211 = vmatprep.subr.mxu0 0.0
  %212 = vmatpush1.msra.mxu0 0.0
  %213 = vmatprep.subr.mxu0 0.0
  %214 = vmatpush1.msra.mxu0 0.0
  %215 = vmatprep.subr.mxu0 0.0
  %216 = vmatpush1.msra.mxu0 0.0
  %217 = vmatprep.subr.mxu0 0.0
  %218 = vmatpush1.msra.mxu0 0.0
  %219 = vmatprep.subr.mxu0 0.0
  %220 = vmatpush1.msra.mxu0 0.0
  %221 = vmatprep.subr.mxu0 0.0
  %222 = vmatpush1.msra.mxu0 0.0
  %223 = vmatprep.subr.mxu0 0.0
  %224 = vmatpush1.msra.mxu0 0.0
  %225 = vmatprep.subr.mxu0 0.0
  %226 = vmatpush1.msra.mxu0 0.0
  %227 = vmatprep.subr.mxu0 0.0
  %228 = vmatpush1.msra.mxu0 0.0
  %229 = vmatprep.subr.mxu0 0.0
  %230 = vmatpush1.msra.mxu0 0.0
  %231 = vmatprep.subr.mxu0 0.0
  %232 = vmatpush1.msra.mxu0 0.0
  %233 = vmatprep.subr.mxu0 0.0
  %234 = vmatpush1.msra.mxu0 0.0
  %235 = vmatprep.subr.mxu0 0.0
  %236 = vmatpush1.msra.mxu0 0.0
  %237 = vmatprep.subr.mxu0 0.0
  %238 = vmatpush1.msra.mxu0 0.0
  %239 = vmatprep.subr.mxu0 0.0
  %240 = vmatpush1.msra.mxu0 0.0
  %241 = vmatprep.subr.mxu0 0.0
  %242 = vmatpush1.msra.mxu0 0.0
  %243 = vmatprep.subr.mxu0 0.0
  %244 = vmatpush1.msra.mxu0 0.0
  %245 = vmatprep.subr.mxu0 0.0
  %246 = vmatpush1.msra.mxu0 0.0
  %247 = vmatprep.subr.mxu0 0.0
  %248 = vmatpush1.msra.mxu0 0.0
  %249 = vmatprep.subr.mxu0 0.0
  %250 = vmatpush1.msra.mxu0 0.0
  %251 = vmatprep.subr.mxu0 0.0
  %252 = vmatpush1.msra.mxu0 0.0
  %253 = vmatprep.subr.mxu0 0.0
  %254 = vmatpush1.msra.mxu0 0.0
  %255 = vmatprep.subr.mxu0 0.0
  %256 = vmatpush1.msra.mxu0 0.0
  %257 = vmatprep.subr.mxu0 0.0
  %258 = vmatpush1.msra.mxu0 0.0
  %259 = vmatprep.subr.mxu0 0.0
  %260 = vmatpush1.msra.mxu0 0.0
  %261 = vmatprep.subr.mxu0 0.0
  %262 = vmatpush1.msra.mxu0 0.0
  %263 = vmatprep.subr.mxu0 0.0
  %264 = vmatpush1.msra.mxu0 0.0
  %265 = vmatprep.mubr.f32.mxu0 0.0
  %266 = vmatmul.mubr.f32.gmra.mrb[0].mxu0 %v190
  %v267 = vpop.f32.mrb[0].mxu0
  %v268 = vadd.f32 %v171, %v267
  %v269 = vpop.f32.mrb[0].mxu0
  %270 = vmatprep.mubr.f32.mxu0 0.0
  %271 = vmatmul.mubr.f32.gmra.mrb[0].mxu0 %v193
  %v272 = vpop.f32.mrb[0].mxu0
  %v273 = vadd.f32 %v176, %v272
  %v274 = vpop.f32.mrb[0].mxu0
  %275 = vmatprep.mubr.f32.mxu0 0.0
  %276 = vmatmul.mubr.f32.gmra.mrb[0].mxu0 %v196
  %v277 = vpop.f32.mrb[0].mxu0
  %v278 = vadd.f32 %v181, %v277
  %v279 = vpop.f32.mrb[0].mxu0
  %280 = vmatprep.mubr.f32.mxu0 0.0
  %281 = vmatmul.mubr.f32.gmra.mrb[0].mxu0 %v199
  %v282 = vpop.f32.mrb[0].mxu0
  %v283 = vadd.f32 %v186, %v282
  %v284 = vpop.f32.mrb[0].mxu0
  %285 = vdwg.mxu0
  %v286 = vmax.f32 %v268, 0.0
  %v287 = vmax.f32 %v273, 0.0
  %v288 = vmax.f32 %v278, 0.0
  %v289 = vmax.f32 %v283, 0.0
  %v290 = vld [vmem:[%s5] sm:$0x1]
  %s291 = sld [smem:[#allocation2]]
  %v292 = vstv %s291
  %v294 = vsel %vm188, %v290, 0
  %296 = vmatprep.subr.mxu0 0.0
  %297 = vmatpush1.msra.mxu0 %v286
  %298 = vmatprep.subr.mxu0 0.0
  %299 = vmatpush1.msra.mxu0 %v287
  %300 = vmatprep.subr.mxu0 0.0
  %301 = vmatpush1.msra.mxu0 %v288
  %302 = vmatprep.subr.mxu0 0.0
  %303 = vmatpush1.msra.mxu0 %v289
  %304 = vmatprep.subr.mxu0 0.0
  %305 = vmatpush1.msra.mxu0 0.0
  %306 = vmatprep.subr.mxu0 0.0
  %307 = vmatpush1.msra.mxu0 0.0
  %308 = vmatprep.subr.mxu0 0.0
  %309 = vmatpush1.msra.mxu0 0.0
  %310 = vmatprep.subr.mxu0 0.0
  %311 = vmatpush1.msra.mxu0 0.0
  %312 = vmatprep.subr.mxu0 0.0
  %313 = vmatpush1.msra.mxu0 0.0
  %314 = vmatprep.subr.mxu0 0.0
  %315 = vmatpush1.msra.mxu0 0.0
  %316 = vmatprep.subr.mxu0 0.0
  %317 = vmatpush1.msra.mxu0 0.0
  %318 = vmatprep.subr.mxu0 0.0
  %319 = vmatpush1.msra.mxu0 0.0
  %320 = vmatprep.subr.mxu0 0.0
  %321 = vmatpush1.msra.mxu0 0.0
  %322 = vmatprep.subr.mxu0 0.0
  %323 = vmatpush1.msra.mxu0 0.0
  %324 = vmatprep.subr.mxu0 0.0
  %325 = vmatpush1.msra.mxu0 0.0
  %326 = vmatprep.subr.mxu0 0.0
  %327 = vmatpush1.msra.mxu0 0.0
  %328 = vmatprep.subr.mxu0 0.0
  %329 = vmatpush1.msra.mxu0 0.0
  %330 = vmatprep.subr.mxu0 0.0
  %331 = vmatpush1.msra.mxu0 0.0
  %332 = vmatprep.subr.mxu0 0.0
  %333 = vmatpush1.msra.mxu0 0.0
  %334 = vmatprep.subr.mxu0 0.0
  %335 = vmatpush1.msra.mxu0 0.0
  %336 = vmatprep.subr.mxu0 0.0
  %337 = vmatpush1.msra.mxu0 0.0
  %338 = vmatprep.subr.mxu0 0.0
  %339 = vmatpush1.msra.mxu0 0.0
  %340 = vmatprep.subr.mxu0 0.0
  %341 = vmatpush1.msra.mxu0 0.0
  %342 = vmatprep.subr.mxu0 0.0
  %343 = vmatpush1.msra.mxu0 0.0
  %344 = vmatprep.subr.mxu0 0.0
  %345 = vmatpush1.msra.mxu0 0.0
  %346 = vmatprep.subr.mxu0 0.0
  %347 = vmatpush1.msra.mxu0 0.0
  %348 = vmatprep.subr.mxu0 0.0
  %349 = vmatpush1.msra.mxu0 0.0
  %350 = vmatprep.subr.mxu0 0.0
  %351 = vmatpush1.msra.mxu0 0.0
  %352 = vmatprep.subr.mxu0 0.0
  %353 = vmatpush1.msra.mxu0 0.0
  %354 = vmatprep.subr.mxu0 0.0
  %355 = vmatpush1.msra.mxu0 0.0
  %356 = vmatprep.subr.mxu0 0.0
  %357 = vmatpush1.msra.mxu0 0.0
  %358 = vmatprep.subr.mxu0 0.0
  %359 = vmatpush1.msra.mxu0 0.0
  %360 = vmatprep.mubr.f32.mxu0 0.0
  %361 = vmatmul.mubr.f32.gmra.mrb[0].mxu0 %v294
  %v362 = vpop.f32.mrb[0].mxu0
  %v363 = vadd.f32 %v292, %v362
  %v364 = vpop.f32.mrb[0].mxu0
  %365 = vdwg.mxu0
  %366 = vst [vmem:[%s7] sm:$0x1] %v363
  // Predicated region
  $region30: #{critic_forward.1} parent=0 // pred_check
    _
  $region31: #{critic_forward.1} parent=0 // pred_check_branch
    %368 = sbr.rel (0) target = $region33
  $region32: #{critic_forward.1} parent=0 // pred_region
    _
  $region33: #{critic_forward.1} parent=0 // pred_fallthru
    _
  // Predicated region
  $region34: #{critic_forward.1} parent=0 // pred_check
    _
  $region35: #{critic_forward.1} parent=0 // pred_check_branch
    %370 = sbr.rel (0) target = $region37
  $region36: #{critic_forward.1} parent=0 // pred_region
    _
  $region37: #{critic_forward.1} parent=0 // pred_fallthru
    _

</llo_original>
